<compile_context>
chip_gen: v6e
topology: v6e:2x2x1
jax: 0.10.0
libtpu: 0.0.40
codegen_flags: <defaults>
</compile_context>

<pallas_src>
import functools

import jax
import jax.numpy as jnp
from jax import lax
from jax.experimental import pallas as pl
from jax.experimental.pallas import tpu as pltpu

BN_EPS = 1e-5
LANE = 128


def _round_up(x, m):
    return (x + m - 1) // m * m


def conv_bn_relu_kernel(x_ref, w_ref, scale_ref, shift_ref, o_ref, *,
                        K: int, stride: int, tile_h: int, apply_relu: bool):
    """One (batch, output-row-tile) grid step.

    x_ref     : (1, Hp, Wc)      bf16  full padded plane (resident per batch), Wc = pad128(Wp*C_in)
    w_ref     : (K*Wc, Nc)       bf16  Toeplitz-lowered weights, Nc = pad128(W_out*C_out)
    scale_ref : (1, Nc)          f32   folded BN scale, lane-packed over (w_out, c_out)
    shift_ref : (1, Nc)          f32   folded BN shift (+ conv bias)
    o_ref     : (1, tile_h, Nc)  f32
    """
    h = pl.program_id(1)
    rows_in = (tile_h - 1) * stride + K                       # halo'd input rows for this tile
    row0 = pl.multiple_of(h * (tile_h * stride), tile_h * stride)
    xw = x_ref[0, pl.ds(row0, rows_in), :]                    # (rows_in, Wc) bf16

    # Lane-concat the K row-shifted views -> (tile_h, K*Wc). The kw taps (and W-stride)
    # live inside w_ref, so the whole K*K*C_in contraction is a single MXU matmul.
    span = (tile_h - 1) * stride + 1
    x_stack = jnp.concatenate(
        [xw[kh:kh + span:stride, :] for kh in range(K)], axis=-1)

    acc = jnp.dot(x_stack, w_ref[...], preferred_element_type=jnp.float32)

    y = acc * scale_ref[...] + shift_ref[...]                 # fused BN(eval)/bias, f32, lane-dense
    if apply_relu:
        y = jnp.maximum(y, 0.0)
    o_ref[0] = y.astype(o_ref.dtype)


def conv_module_forward(x_nchw, weight, conv_bias, bn, *, stride=1, padding=1,
                        act="relu"):
    """ConvModule.forward (eval mode).

    x_nchw : (B, C_in, H, W) f32 (PyTorch layout)
    weight : (C_out, C_in, K, K) f32 (PyTorch Conv2d layout)
    conv_bias : (C_out,) or None
    bn : dict(gamma, beta, mean, var, eps) or None
    Returns (B, C_out, H_out, W_out) f32.
    """
    B, C_in, H, W = x_nchw.shape
    C_out, _, K, K2 = weight.shape
    assert K == K2
    H_out = (H + 2 * padding - K) // stride + 1
    W_out = (W + 2 * padding - K) // stride + 1
    Hp, Wp = H + 2 * padding, W + 2 * padding

    Wc = _round_up(Wp * C_in, LANE)        # lane-dense packed input width
    Nc = _round_up(W_out * C_out, LANE)    # lane-dense packed output width

    # --- input: NHWC, spatial zero-pad, bf16 cast, (Hp, Wp*C_in) lane packing (plain XLA) ---
    x = jnp.transpose(x_nchw, (0, 2, 3, 1)).astype(jnp.bfloat16)
    x = jnp.pad(x, ((0, 0), (padding, padding), (padding, padding), (0, 0)))
    x = x.reshape(B, Hp, Wp * C_in)
    x = jnp.pad(x, ((0, 0), (0, 0), (0, Wc - Wp * C_in)))

    # --- weights: Toeplitz lowering along W so kw and the W-stride live in the matmul ---
    # w_big[kh, w_in, c, w_out, o] = weight[o, c, kh, w_in - w_out*stride] (0 outside the taps)
    w_t = jnp.transpose(weight, (2, 3, 1, 0)).astype(jnp.float32)        # (kh, kw, c, o)
    hit = (jnp.arange(Wp)[:, None, None]
           == jnp.arange(W_out)[None, :, None] * stride
              + jnp.arange(K)[None, None, :]).astype(jnp.float32)        # (Wp, W_out, K)
    w_big = jnp.einsum('pwk,hkco->hpcwo', hit, w_t)                      # (K, Wp, C_in, W_out, C_out)
    w_big = w_big.reshape(K, Wp * C_in, W_out * C_out)
    w_big = jnp.pad(w_big, ((0, 0), (0, Wc - Wp * C_in), (0, Nc - W_out * C_out)))
    w_big = w_big.reshape(K * Wc, Nc).astype(jnp.bfloat16)

    # --- fold BN(eval) + conv bias into per-channel scale/shift, lane-packed over (w_out, c) ---
    if bn is not None:
        inv = 1.0 / jnp.sqrt(bn["var"] + bn["eps"])
        scale = bn["gamma"] * inv
        shift = bn["beta"] - bn["mean"] * scale
    else:
        scale = jnp.ones((C_out,), jnp.float32)
        shift = jnp.zeros((C_out,), jnp.float32)
    if conv_bias is not None:
        shift = shift + scale * conv_bias
    scale_p = jnp.pad(jnp.tile(scale.astype(jnp.float32), W_out),
                      (0, Nc - W_out * C_out)).reshape(1, Nc)
    shift_p = jnp.pad(jnp.tile(shift.astype(jnp.float32), W_out),
                      (0, Nc - W_out * C_out)).reshape(1, Nc)

    # Row tile: 8 output rows at demo sizes (exercises the tiled path + the 2nd parallel
    # grid axis); for production pick the largest multiple-of-8 divisor that fits VMEM.
    tile_h = 8 if H_out % 8 == 0 else H_out
    n_h = H_out // tile_h
    # TODO(synk): for large planes, stream only the halo'd row window per step via a manual
    # make_async_copy on a pl.ANY x ref instead of keeping the full padded plane resident
    # (needed to stay within v7x's 64 MiB VMEM per TensorCore).

    kernel = functools.partial(conv_bn_relu_kernel, K=K, stride=stride,
                               tile_h=tile_h, apply_relu=(act == "relu"))

    out = pl.pallas_call(
        kernel,
        out_shape=jax.ShapeDtypeStruct((B, H_out, Nc), jnp.float32),
        grid_spec=pltpu.PrefetchScalarGridSpec(
            num_scalar_prefetch=0,
            grid=(B, n_h),
            in_specs=[
                pl.BlockSpec((1, Hp, Wc), lambda b, h: (b, 0, 0)),    # x (resident per batch)
                pl.BlockSpec((K * Wc, Nc), lambda b, h: (0, 0)),      # weights (resident)
                pl.BlockSpec((1, Nc), lambda b, h: (0, 0)),           # scale
                pl.BlockSpec((1, Nc), lambda b, h: (0, 0)),           # shift
            ],
            out_specs=pl.BlockSpec((1, tile_h, Nc), lambda b, h: (b, h, 0)),
        ),
        compiler_params=pltpu.CompilerParams(
            dimension_semantics=("parallel", "parallel"),
            # 64 MiB is fine on v5e/v6e (128 MiB physical); keep <= 48 MiB on v7x (64 MiB/TC).
            vmem_limit_bytes=64 * 1024 * 1024,
        ),
        cost_estimate=pl.CostEstimate(
            flops=2 * B * H_out * W_out * K * K * C_in * C_out,
            transcendentals=0,
            bytes_accessed=int(x.size) * 2 + int(w_big.size) * 2
                           + B * H_out * Nc * 4,
        ),
    )(x, w_big, scale_p, shift_p)

    out = out[..., :W_out * C_out].reshape(B, H_out, W_out, C_out)
    return jnp.transpose(out, (0, 3, 1, 2))


def reference_forward(x, weight, conv_bias, bn, *, stride, padding, act):
    """Plain-JAX reference mirroring the PyTorch ConvModule (eval mode)."""
    y = lax.conv_general_dilated(
        x, weight, window_strides=(stride, stride),
        padding=[(padding, padding), (padding, padding)],
        dimension_numbers=("NCHW", "OIHW", "NCHW"))
    if conv_bias is not None:
        y = y + conv_bias.reshape(1, -1, 1, 1)
    if bn is not None:
        inv = 1.0 / jnp.sqrt(bn["var"] + bn["eps"])
        g = (bn["gamma"] * inv).reshape(1, -1, 1, 1)
        y = (y - bn["mean"].reshape(1, -1, 1, 1)) * g + bn["beta"].reshape(1, -1, 1, 1)
    if act == "relu":
        y = jnp.maximum(y, 0.0)
    return y


if __name__ == "__main__":
    # ConvModule(in_channels=4, out_channels=8, kernel_size=3, stride=1, padding=1,
    #            norm_cfg=dict(type='BN'), act_cfg=dict(type='ReLU'))
    # bias='auto' with norm => conv has no bias.
    B, C_in, H, W = 2, 4, 16, 16
    C_out, K, stride, padding = 8, 3, 1, 1

    key = jax.random.PRNGKey(0)
    kx, kw, k1, k2, k3, k4 = jax.random.split(key, 6)

    x = jax.random.normal(kx, (B, C_in, H, W), jnp.float32)

    # kaiming_normal_(mode='fan_out', nonlinearity='relu'): std = sqrt(2 / (C_out*K*K))
    w_std = (2.0 / (C_out * K * K)) ** 0.5
    weight = jax.random.normal(kw, (C_out, C_in, K, K), jnp.float32) * w_std
    conv_bias = None

    # BatchNorm2d in eval mode (non-trivial running stats to exercise the fused path).
    bn = {
        "gamma": 1.0 + 0.1 * jax.random.normal(k1, (C_out,), jnp.float32),
        "beta": 0.1 * jax.random.normal(k2, (C_out,), jnp.float32),
        "mean": 0.1 * jax.random.normal(k3, (C_out,), jnp.float32),
        "var": jax.random.uniform(k4, (C_out,), jnp.float32, 0.5, 1.5),
        "eps": BN_EPS,
    }

    out = conv_module_forward(x, weight, conv_bias, bn,
                              stride=stride, padding=padding, act="relu")
    out = jax.block_until_ready(out)

    ref = reference_forward(x, weight, conv_bias, bn,
                            stride=stride, padding=padding, act="relu")

    assert out.shape == (B, C_out, H, W)
    # bf16 MXU operands with f32 accumulation -> relax tolerance vs the f32 reference.
    assert jnp.allclose(out, ref, atol=5e-2, rtol=5e-2), "mismatch vs JAX reference"

    print("KERNEL_OK")
</pallas_src>

<mosaic_0001>
module attributes {stable_mosaic.version = 11 : i64} {
  func.func @conv_bn_relu_kernel(%arg0: i32, %arg1: i32, %arg2: memref<1x18x128xbf16, #tpu.memory_space<vmem>>, %arg3: memref<384x128xbf16, #tpu.memory_space<vmem>>, %arg4: memref<1x128xf32, #tpu.memory_space<vmem>>, %arg5: memref<1x128xf32, #tpu.memory_space<vmem>>, %arg6: memref<1x8x128xf32, #tpu.memory_space<vmem>>) attributes {dimension_semantics = [#tpu.dimension_semantics<parallel>, #tpu.dimension_semantics<parallel>], iteration_bounds = array<i64: 2, 2>, scalar_prefetch = 0 : i64, scratch_operands = 0 : i64, tpu.core_type = #tpu.core_type<tc>, window_params = [{transform_indices = @transform_0, window_bounds = array<i64: 1, 18, 128>}, {pipeline_mode = #tpu.pipeline_mode<synchronous>, transform_indices = @transform_1, window_bounds = array<i64: 384, 128>}, {pipeline_mode = #tpu.pipeline_mode<synchronous>, transform_indices = @transform_2, window_bounds = array<i64: 1, 128>}, {pipeline_mode = #tpu.pipeline_mode<synchronous>, transform_indices = @transform_3, window_bounds = array<i64: 1, 128>}, {transform_indices = @transform_4, window_bounds = array<i64: 1, 8, 128>}]} {
    %c8_i32 = arith.constant 8 : i32
    %0 = arith.muli %arg1, %c8_i32 : i32
    %1 = tpu.assume_multiple %0, 8 : i32
    %c0 = arith.constant 0 : index
    %2 = arith.index_cast %1 : i32 to index
    %c0_0 = arith.constant 0 : index
    %3 = vector.load %arg2[%c0, %2, %c0_0] : memref<1x18x128xbf16, #tpu.memory_space<vmem>>, vector<1x10x128xbf16>
    %4 = vector.shape_cast %3 : vector<1x10x128xbf16> to vector<10x128xbf16>
    %5 = vector.extract_strided_slice %4 {offsets = [0, 0], sizes = [8, 128], strides = [1, 1]} : vector<10x128xbf16> to vector<8x128xbf16>
    %6 = vector.extract_strided_slice %4 {offsets = [1, 0], sizes = [8, 128], strides = [1, 1]} : vector<10x128xbf16> to vector<8x128xbf16>
    %7 = vector.extract_strided_slice %4 {offsets = [2, 0], sizes = [8, 128], strides = [1, 1]} : vector<10x128xbf16> to vector<8x128xbf16>
    %8 = tpu.concatenate %5, %6, %7 in 1 : vector<8x128xbf16>, vector<8x128xbf16>, vector<8x128xbf16> -> vector<8x384xbf16>
    %c0_1 = arith.constant 0 : index
    %c0_2 = arith.constant 0 : index
    %9 = vector.load %arg3[%c0_1, %c0_2] : memref<384x128xbf16, #tpu.memory_space<vmem>>, vector<384x128xbf16>
    %cst = arith.constant dense<0.000000e+00> : vector<8x128xf32>
    %10 = tpu.matmul %8, %9, %cst {dimension_numbers = #tpu.dot_dimension_numbers<[1], [0], [0], [1], [0, 0, 1, 1], [], []>} : vector<8x384xbf16>, vector<384x128xbf16>, vector<8x128xf32> -> vector<8x128xf32>
    %c0_3 = arith.constant 0 : index
    %c0_4 = arith.constant 0 : index
    %11 = vector.load %arg4[%c0_3, %c0_4] : memref<1x128xf32, #tpu.memory_space<vmem>>, vector<1x128xf32>
    %12 = vector.broadcast %11 : vector<1x128xf32> to vector<8x128xf32>
    %13 = arith.mulf %10, %12 : vector<8x128xf32>
    %c0_5 = arith.constant 0 : index
    %c0_6 = arith.constant 0 : index
    %14 = vector.load %arg5[%c0_5, %c0_6] : memref<1x128xf32, #tpu.memory_space<vmem>>, vector<1x128xf32>
    %15 = vector.broadcast %14 : vector<1x128xf32> to vector<8x128xf32>
    %16 = arith.addf %13, %15 : vector<8x128xf32>
    %cst_7 = arith.constant 0.000000e+00 : f32
    %17 = vector.broadcast %cst_7 : f32 to vector<8x128xf32>
    %18 = arith.maximumf %16, %17 : vector<8x128xf32>
    %c0_8 = arith.constant 0 : index
    %c0_9 = arith.constant 0 : index
    %c0_10 = arith.constant 0 : index
    %19 = vector.load %arg6[%c0_8, %c0_9, %c0_10] : memref<1x8x128xf32, #tpu.memory_space<vmem>>, vector<1x8x128xf32>
    %20 = vector.shape_cast %19 : vector<1x8x128xf32> to vector<8x128xf32>
    %21 = vector.shape_cast %18 : vector<8x128xf32> to vector<1x8x128xf32>
    tpu.vector_store %arg6[%c0_8, %c0_9, %c0_10], %21 {strides = array<i32>} : memref<1x8x128xf32, #tpu.memory_space<vmem>>, vector<1x8x128xf32>,
    return
  }
  func.func @transform_0(%arg0: i32, %arg1: i32) -> (i32, i32, i32) {
    %c0_i32 = arith.constant 0 : i32
    %c0_i32_0 = arith.constant 0 : i32
    %c0_i32_1 = arith.constant 0 : i32
    return %arg0, %c0_i32, %c0_i32_0 : i32, i32, i32
  }
  func.func @transform_1(%arg0: i32, %arg1: i32) -> (i32, i32) {
    %c0_i32 = arith.constant 0 : i32
    %c0_i32_0 = arith.constant 0 : i32
    %c0_i32_1 = arith.constant 0 : i32
    return %c0_i32, %c0_i32_0 : i32, i32
  }
  func.func @transform_2(%arg0: i32, %arg1: i32) -> (i32, i32) {
    %c0_i32 = arith.constant 0 : i32
    %c0_i32_0 = arith.constant 0 : i32
    %c0_i32_1 = arith.constant 0 : i32
    return %c0_i32, %c0_i32_0 : i32, i32
  }
  func.func @transform_3(%arg0: i32, %arg1: i32) -> (i32, i32) {
    %c0_i32 = arith.constant 0 : i32
    %c0_i32_0 = arith.constant 0 : i32
    %c0_i32_1 = arith.constant 0 : i32
    return %c0_i32, %c0_i32_0 : i32, i32
  }
  func.func @transform_4(%arg0: i32, %arg1: i32) -> (i32, i32, i32) {
    %c0_i32 = arith.constant 0 : i32
    %c0_i32_0 = arith.constant 0 : i32
    return %arg0, %arg1, %c0_i32 : i32, i32, i32
  }
}

</mosaic_0001>

<llo_original>
// kernel: tpu_custom_call.1
$region0: #{tpu_custom_call.1}
  #allocation0 [shape = 'u32[]', space=smem, size = 0x4, offset = 0x4, fixed_abs, tag = 'smem constant byte address 0x4 - core index']
  #allocation1 [shape = 'u32[144,128]{1,0:T(1,128)}', space=vmem, size = 0x12000, scoped, tag = 'internal scratch']
  %s0 = inlined_call_operand.vmem [shape: bf16[2,18,128], index: 0, kind: input, shape index: {}]
  %s1 = inlined_call_operand.hbm [shape: bf16[384,128], index: 1, kind: input, shape index: {}]
  %s2 = inlined_call_operand.vmem [shape: f32[1,128], index: 2, kind: input, shape index: {}]
  %s3 = inlined_call_operand.vmem [shape: f32[1,128], index: 3, kind: input, shape index: {}]
  %s4 = inlined_call_operand.hbm [shape: f32[2,16,128], index: 4, kind: output, shape index: {}]
  %s5 = sld [smem:[#allocation0]]
  $region53: #{tpu_custom_call.1} parent=0
    _
  %s7 = ssub.s32 1, %s5
  %s8 = scalar_select 0, %s7, %s5
  $region1: #{tpu_custom_call.1} parent=0
    #allocation2 [shape = 'u8[98304]{0}', space=vmem, size = 0x18000, scoped, tag = 'input window, operand 1, single buffered']
    #allocation3 [shape = 's32[2]{0}', space=sflag, size = 0x8, scoped, tag = 'scoped memory for tpu_custom_call.1']
    #allocation4 [shape = 's32[2]{0}', space=sflag, size = 0x8, scoped, tag = 'scoped memory for tpu_custom_call.1']
    #allocation5 [shape = 'u8[8192]{0}', space=vmem, size = 0x2000, scoped, tag = 'output window, operand 0']
    %9 = vsyncpa [#allocation3], 0
    %10 = vsyncpa [#allocation4], 0
    %s11 = scalar_lea.sflag [#allocation4], 1
    %12 = vsyncpa %s11, 0
    loop: start=0, step=1, limit=6
    $region2: #{tpu_custom_call.1} parent=1 // loop_pre_header
      _
    $region3: #{tpu_custom_call.1} parent=1 // loop_header
      %s14 = sphi 0, %s18
      %p15 = scmp.ge.s32.totalorder %s14, 6
      %s21 = sphi 0, %s33
      %s22 = sphi 0, %s29
      %s23 = sphi 0, %s21
      %s24 = sphi 0, %s22
      %s25 = sphi 0, %s23
      %s26 = sphi 0, %s24
      %s36 = sphi 0, %s38
      %s39 = sphi 0, %s36
      %s40 = sphi 0, %s39
      %s56 = sphi 0, %s40
      %s60 = sphi 0, %s60
      %s62 = sphi 0, %s60
      %s63 = sphi 0, %s62
      %s77 = sphi 0, %s63
      %s81 = sphi 0, %s81
      %s83 = sphi 0, %s81
      %s84 = sphi 0, %s83
      %s98 = sphi 0, %s84
      %s102 = sphi 0, %s102
      %s104 = sphi 0, %s102
      %s105 = sphi 0, %s104
      %s119 = sphi 0, %s105
      %s127 = sphi 0, %s129
      %s130 = sphi 0, %s127
      %s131 = sphi 0, %s130
      %s147 = sphi 0, %s131
    $region4: #{tpu_custom_call.1} parent=1 // loop_header_branch
      %17 = sbr.rel (%p15) target = $region8
    $region5: #{tpu_custom_call.1} parent=1 // loop_body
      %s19 = ssub.s32 %s14, 1
      %s20 = ssub.s32 %s14, 2
      %s27 = sadd.s32 1, %s22
      %p28 = scmp.ge.s32.totalorder %s27, 2
      %s29 = scalar_select %p28, 0, %s27
      %s30 = sadd.s32 1, %s21
      %s31 = scalar_select %p28, %s30, %s21
      %p32 = scmp.ge.s32.totalorder %s31, 2
      %s33 = scalar_select %p32, 0, %s31
      %s34 = ssub.s32 %s21, %s33
      %p35 = scmp.eq.s32.totalorder %s34, 0
      %s37 = sadd.s32 %s36, 1
      %s38 = scalar_select %p35, %s36, %s37
      %p41 = pneg %p35
      %p42 = scmp.eq.s32.totalorder %s14, 3
      %p43 = por %p41, %p42
      %p44 = scmp.ne.s32.totalorder %s36, %s39
      %p45 = scmp.eq.s32.totalorder %s14, 0
      %p46 = por %p44, %p45
      %p47 = scmp.ne.s32.totalorder %s36, %s39
      %p48 = scmp.eq.s32.totalorder %s19, 3
      %p49 = por %p47, %p48
      %p50 = scmp.ne.s32.totalorder %s39, %s40
      %p51 = scmp.eq.s32.totalorder %s19, 0
      %p52 = por %p50, %p51
      %p53 = scmp.ne.s32.totalorder %s39, %s40
      %p54 = scmp.eq.s32.totalorder %s20, 3
      %p55 = por %p53, %p54
      %p57 = scmp.ne.s32.totalorder %s40, %s56
      %p58 = scmp.eq.s32.totalorder %s20, 0
      %p59 = por %p57, %p58
      %s61 = sadd.s32 %s60, 1
      %p64 = scmp.eq.s32.totalorder %s14, 3
      %p65 = scmp.ne.s32.totalorder %s60, %s62
      %p66 = scmp.eq.s32.totalorder %s14, 0
      %p67 = por %p65, %p66
      %p68 = scmp.ne.s32.totalorder %s60, %s62
      %p69 = scmp.eq.s32.totalorder %s19, 3
      %p70 = por %p68, %p69
      %p71 = scmp.ne.s32.totalorder %s62, %s63
      %p72 = scmp.eq.s32.totalorder %s19, 0
      %p73 = por %p71, %p72
      %p74 = scmp.ne.s32.totalorder %s62, %s63
      %p75 = scmp.eq.s32.totalorder %s20, 3
      %p76 = por %p74, %p75
      %p78 = scmp.ne.s32.totalorder %s63, %s77
      %p79 = scmp.eq.s32.totalorder %s20, 0
      %p80 = por %p78, %p79
      %s82 = sadd.s32 %s81, 1
      %p85 = scmp.eq.s32.totalorder %s14, 3
      %p86 = scmp.ne.s32.totalorder %s81, %s83
      %p87 = scmp.eq.s32.totalorder %s14, 0
      %p88 = por %p86, %p87
      %p89 = scmp.ne.s32.totalorder %s81, %s83
      %p90 = scmp.eq.s32.totalorder %s19, 3
      %p91 = por %p89, %p90
      %p92 = scmp.ne.s32.totalorder %s83, %s84
      %p93 = scmp.eq.s32.totalorder %s19, 0
      %p94 = por %p92, %p93
      %p95 = scmp.ne.s32.totalorder %s83, %s84
      %p96 = scmp.eq.s32.totalorder %s20, 3
      %p97 = por %p95, %p96
      %p99 = scmp.ne.s32.totalorder %s84, %s98
      %p100 = scmp.eq.s32.totalorder %s20, 0
      %p101 = por %p99, %p100
      %s103 = sadd.s32 %s102, 1
      %p106 = scmp.eq.s32.totalorder %s14, 3
      %p107 = scmp.ne.s32.totalorder %s102, %s104
      %p108 = scmp.eq.s32.totalorder %s14, 0
      %p109 = por %p107, %p108
      %p110 = scmp.ne.s32.totalorder %s102, %s104
      %p111 = scmp.eq.s32.totalorder %s19, 3
      %p112 = por %p110, %p111
      %p113 = scmp.ne.s32.totalorder %s104, %s105
      %p114 = scmp.eq.s32.totalorder %s19, 0
      %p115 = por %p113, %p114
      %p116 = scmp.ne.s32.totalorder %s104, %s105
      %p117 = scmp.eq.s32.totalorder %s20, 3
      %p118 = por %p116, %p117
      %p120 = scmp.ne.s32.totalorder %s105, %s119
      %p121 = scmp.eq.s32.totalorder %s20, 0
      %p122 = por %p120, %p121
      %s123 = ssub.s32 %s21, %s33
      %s124 = ssub.s32 %s22, %s29
      %s125 = sor.u32 %s123, %s124
      %p126 = scmp.eq.s32.totalorder %s125, 0
      %s128 = sadd.s32 %s127, 1
      %s129 = scalar_select %p126, %s127, %s128
      %p132 = pneg %p126
      %p133 = scmp.eq.s32.totalorder %s14, 3
      %p134 = por %p132, %p133
      %p135 = scmp.ne.s32.totalorder %s127, %s130
      %p136 = scmp.eq.s32.totalorder %s14, 0
      %p137 = por %p135, %p136
      %p138 = scmp.ne.s32.totalorder %s127, %s130
      %p139 = scmp.eq.s32.totalorder %s19, 3
      %p140 = por %p138, %p139
      %p141 = scmp.ne.s32.totalorder %s130, %s131
      %p142 = scmp.eq.s32.totalorder %s19, 0
      %p143 = por %p141, %p142
      %p144 = scmp.ne.s32.totalorder %s130, %s131
      %p145 = scmp.eq.s32.totalorder %s20, 3
      %p146 = por %p144, %p145
      %p148 = scmp.ne.s32.totalorder %s131, %s147
      %p149 = scmp.eq.s32.totalorder %s20, 0
      %p150 = por %p148, %p149
      %p151 = scmp.le.s32.totalorder 1, %s14
      %p152 = scmp.lt.s32.totalorder %s14, 5
      %p153 = pnand %p151, %p152
      %p154 = pneg %p153
      // Predicated region
      $region9: #{tpu_custom_call.1} parent=5 // pred_check
        _
      $region10: #{tpu_custom_call.1} parent=5 // pred_check_branch
        %156 = sbr.rel (%p153) target = $region12
      $region11: #{tpu_custom_call.1} parent=5 // pred_region
        %s157 = ssub.s32 %s14, 1
        // Predicated region
        $region13: #{tpu_custom_call.1} parent=11 // pred_check
          %p158 = pneg %p73
        $region14: #{tpu_custom_call.1} parent=11 // pred_check_branch
          %160 = sbr.rel (%p158) target = $region16
        $region15: #{tpu_custom_call.1} parent=11 // pred_region
          %s162 = ssub.s32 3072, 3072
          %163 = vsyncadd [#allocation3], %s162
          %s164 = sshll.u32 [#allocation2], 4
          %s165 = int_to_ptr.vmem [resolvable:$true] %s164
          %170 = dma.hbm_to_vmem [thread:$0]  %s1, 3072, %s165, [#allocation3], 64, 64, 4
        $region16: #{tpu_custom_call.1} parent=11 // pred_fallthru
          _
        // Predicated region
        $region17: #{tpu_custom_call.1} parent=11 // pred_check
          %p171 = pneg %p94
        $region18: #{tpu_custom_call.1} parent=11 // pred_check_branch
          %173 = sbr.rel (%p171) target = $region20
        $region19: #{tpu_custom_call.1} parent=11 // pred_region
          _
        $region20: #{tpu_custom_call.1} parent=11 // pred_fallthru
          _
        // Predicated region
        $region21: #{tpu_custom_call.1} parent=11 // pred_check
          %p174 = pneg %p115
        $region22: #{tpu_custom_call.1} parent=11 // pred_check_branch
          %176 = sbr.rel (%p174) target = $region24
        $region23: #{tpu_custom_call.1} parent=11 // pred_region
          _
        $region24: #{tpu_custom_call.1} parent=11 // pred_fallthru
          _
      $region12: #{tpu_custom_call.1} parent=5 // pred_fallthru
        _
      %p177 = scmp.lt.s32.totalorder %s14, 4
      // Predicated region
      $region25: #{tpu_custom_call.1} parent=5 // pred_check
        %p178 = pneg %p177
      $region26: #{tpu_custom_call.1} parent=5 // pred_check_branch
        %180 = sbr.rel (%p178) target = $region28
      $region27: #{tpu_custom_call.1} parent=5 // pred_region
        // Predicated region
        $region29: #{tpu_custom_call.1} parent=27 // pred_check
          %p181 = pneg %p46
        $region30: #{tpu_custom_call.1} parent=27 // pred_check_branch
          %183 = sbr.rel (%p181) target = $region32
        $region31: #{tpu_custom_call.1} parent=27 // pred_region
          %p184 = scmp.lt.s32.totalorder %s21, 1
          %s185 = scalar_select %p184, %s21, 1
          %s186 = smul.addr %s185, 3
          %s187 = smul.addr %s186, 4
          %s188 = scalar_lea.vmem %s0, %s187
        $region32: #{tpu_custom_call.1} parent=27 // pred_fallthru
          _
      $region28: #{tpu_custom_call.1} parent=5 // pred_fallthru
        _
      %p189 = scmp.le.s32.totalorder 1, %s14
      %p190 = scmp.lt.s32.totalorder %s14, 5
      %p191 = pnand %p189, %p190
      %p192 = pneg %p191
      // Predicated region
      $region33: #{tpu_custom_call.1} parent=5 // pred_check
        _
      $region34: #{tpu_custom_call.1} parent=5 // pred_check_branch
        %194 = sbr.rel (%p191) target = $region36
      $region35: #{tpu_custom_call.1} parent=5 // pred_region
        %s195 = ssub.s32 %s14, 1
        // Predicated region
        $region37: #{tpu_custom_call.1} parent=35 // pred_check
          %p196 = pneg %p73
        $region38: #{tpu_custom_call.1} parent=35 // pred_check_branch
          %198 = sbr.rel (%p196) target = $region40
        $region39: #{tpu_custom_call.1} parent=35 // pred_region
          %199 = dma.done [#allocation3], 3072
        $region40: #{tpu_custom_call.1} parent=35 // pred_fallthru
          _
        %p200 = scmp.lt.s32.totalorder %s23, 1
        %s201 = scalar_select %p200, %s23, 1
        %s202 = smul.addr %s201, 3
        %s203 = smul.addr %s202, 4
        %s204 = scalar_lea.vmem %s0, %s203
        %p205 = pneg %p52
        %p206 = pneg %p49
        %p207 = pneg %p73
        %p208 = pneg %p70
        %p209 = pneg %p94
        %p210 = pneg %p91
        %p211 = pneg %p115
        %p212 = pneg %p112
        %p213 = pneg %p143
        %p214 = pneg %p140
        %s215 = sand.u32 %s130, 1
        %s216 = scalar_lea.sflag [#allocation4], %s215
        %s217 = sand.u32 %s130, 1
        %s218 = smul.addr %s217, 8
        %s219 = scalar_lea.vmem [#allocation5], %s218
        %p220 = scmp.lt.s32.totalorder %s23, 1
        %s221 = scalar_select %p220, %s23, 1
        %s222 = smul.addr %s221, 3
        %s223 = smul.addr %s222, 4
        %s224 = scalar_lea.vmem %s0, %s223
        %s226 = smul.u32 %s24, 8
        %s227 = sshra.s32 %s226, 3
        %s228 = sand.u32 %s226, 7
        %s229 = smul.addr %s227, 4
        %s230 = scalar_lea.vmem %s224, %s229
        %v231 = vld [vmem:[%s230] sm:$0xf]
        %v232 = vld [vmem:[%s230 + $0x4] sm:$0x1]
        %v235 = vunpack.c.l.b16 %v231
        %v236 = vunpack.c.l.b16 %v232
        %v237 = vpack.c.b16 %v236, %v235
        %v239 = vshrl.u32 %v237, 16
        %v241 = vshll.u32 %v237, 16
        %v243 = vrot.slane %v241, 1
        %v244 = vor.u32 %v239, %v243
        %v246 = vrot.slane %v237, 1
        %v248 = vld [vmem:[#allocation2] sm:$0xf]
        %v249 = vld [vmem:[#allocation2 + $0x4] sm:$0xf]
        %v250 = vld [vmem:[#allocation2 + $0x8] sm:$0xf]
        %v251 = vld [vmem:[#allocation2 + $0xc] sm:$0xf]
        %v252 = vld [vmem:[#allocation2 + $0x10] sm:$0xf]
        %v253 = vld [vmem:[#allocation2 + $0x14] sm:$0xf]
        %v254 = vld [vmem:[#allocation2 + $0x18] sm:$0xf]
        %v255 = vld [vmem:[#allocation2 + $0x1c] sm:$0xf]
        %v256 = vld [vmem:[#allocation2 + $0x20] sm:$0xf]
        %v257 = vld [vmem:[#allocation2 + $0x24] sm:$0xf]
        %v258 = vld [vmem:[#allocation2 + $0x28] sm:$0xf]
        %v259 = vld [vmem:[#allocation2 + $0x2c] sm:$0xf]
        %v260 = vld [vmem:[#allocation2 + $0x30] sm:$0xf]
        %v261 = vld [vmem:[#allocation2 + $0x34] sm:$0xf]
        %v262 = vld [vmem:[#allocation2 + $0x38] sm:$0xf]
        %v263 = vld [vmem:[#allocation2 + $0x3c] sm:$0xf]
        %v264 = vld [vmem:[#allocation2 + $0x40] sm:$0xf]
        %v265 = vld [vmem:[#allocation2 + $0x44] sm:$0xf]
        %v266 = vld [vmem:[#allocation2 + $0x48] sm:$0xf]
        %v267 = vld [vmem:[#allocation2 + $0x4c] sm:$0xf]
        %v268 = vld [vmem:[#allocation2 + $0x50] sm:$0xf]
        %v269 = vld [vmem:[#allocation2 + $0x54] sm:$0xf]
        %v270 = vld [vmem:[#allocation2 + $0x58] sm:$0xf]
        %v271 = vld [vmem:[#allocation2 + $0x5c] sm:$0xf]
        %v272 = vld [vmem:[#allocation2 + $0x60] sm:$0xf]
        %v273 = vld [vmem:[#allocation2 + $0x64] sm:$0xf]
        %v274 = vld [vmem:[#allocation2 + $0x68] sm:$0xf]
        %v275 = vld [vmem:[#allocation2 + $0x6c] sm:$0xf]
        %v276 = vld [vmem:[#allocation2 + $0x70] sm:$0xf]
        %v277 = vld [vmem:[#allocation2 + $0x74] sm:$0xf]
        %v278 = vld [vmem:[#allocation2 + $0x78] sm:$0xf]
        %v279 = vld [vmem:[#allocation2 + $0x7c] sm:$0xf]
        %v280 = vld [vmem:[#allocation2 + $0x80] sm:$0xf]
        %v281 = vld [vmem:[#allocation2 + $0x84] sm:$0xf]
        %v282 = vld [vmem:[#allocation2 + $0x88] sm:$0xf]
        %v283 = vld [vmem:[#allocation2 + $0x8c] sm:$0xf]
        %v284 = vld [vmem:[#allocation2 + $0x90] sm:$0xf]
        %v285 = vld [vmem:[#allocation2 + $0x94] sm:$0xf]
        %v286 = vld [vmem:[#allocation2 + $0x98] sm:$0xf]
        %v287 = vld [vmem:[#allocation2 + $0x9c] sm:$0xf]
        %v288 = vld [vmem:[#allocation2 + $0xa0] sm:$0xf]
        %v289 = vld [vmem:[#allocation2 + $0xa4] sm:$0xf]
        %v290 = vld [vmem:[#allocation2 + $0xa8] sm:$0xf]
        %v291 = vld [vmem:[#allocation2 + $0xac] sm:$0xf]
        %v292 = vld [vmem:[#allocation2 + $0xb0] sm:$0xf]
        %v293 = vld [vmem:[#allocation2 + $0xb4] sm:$0xf]
        %v294 = vld [vmem:[#allocation2 + $0xb8] sm:$0xf]
        %v295 = vld [vmem:[#allocation2 + $0xbc] sm:$0xf]
        %v344 = vunpack.c.l.b16 %v248
        %v345 = vunpack.c.l.b16 %v249
        %v346 = vunpack.c.l.b16 %v250
        %v347 = vunpack.c.l.b16 %v251
        %v348 = vunpack.c.l.b16 %v252
        %v349 = vunpack.c.l.b16 %v253
        %v350 = vunpack.c.l.b16 %v254
        %v351 = vunpack.c.l.b16 %v255
        %v352 = vunpack.c.l.b16 %v256
        %v353 = vunpack.c.l.b16 %v257
        %v354 = vunpack.c.l.b16 %v258
        %v355 = vunpack.c.l.b16 %v259
        %v356 = vunpack.c.l.b16 %v260
        %v357 = vunpack.c.l.b16 %v261
        %v358 = vunpack.c.l.b16 %v262
        %v359 = vunpack.c.l.b16 %v263
        %v360 = vunpack.c.l.b16 %v264
        %v361 = vunpack.c.l.b16 %v265
        %v362 = vunpack.c.l.b16 %v266
        %v363 = vunpack.c.l.b16 %v267
        %v364 = vunpack.c.l.b16 %v268
        %v365 = vunpack.c.l.b16 %v269
        %v366 = vunpack.c.l.b16 %v270
        %v367 = vunpack.c.l.b16 %v271
        %v368 = vunpack.c.l.b16 %v272
        %v369 = vunpack.c.l.b16 %v273
        %v370 = vunpack.c.l.b16 %v274
        %v371 = vunpack.c.l.b16 %v275
        %v372 = vunpack.c.l.b16 %v276
        %v373 = vunpack.c.l.b16 %v277
        %v374 = vunpack.c.l.b16 %v278
        %v375 = vunpack.c.l.b16 %v279
        %v376 = vunpack.c.l.b16 %v280
        %v377 = vunpack.c.l.b16 %v281
        %v378 = vunpack.c.l.b16 %v282
        %v379 = vunpack.c.l.b16 %v283
        %v380 = vunpack.c.l.b16 %v284
        %v381 = vunpack.c.l.b16 %v285
        %v382 = vunpack.c.l.b16 %v286
        %v383 = vunpack.c.l.b16 %v287
        %v384 = vunpack.c.l.b16 %v288
        %v385 = vunpack.c.l.b16 %v289
        %v386 = vunpack.c.l.b16 %v290
        %v387 = vunpack.c.l.b16 %v291
        %v388 = vunpack.c.l.b16 %v292
        %v389 = vunpack.c.l.b16 %v293
        %v390 = vunpack.c.l.b16 %v294
        %v391 = vunpack.c.l.b16 %v295
        %v392 = vpack.c.b16 %v345, %v344
        %v393 = vpack.c.b16 %v347, %v346
        %v394 = vpack.c.b16 %v349, %v348
        %v395 = vpack.c.b16 %v351, %v350
        %v396 = vpack.c.b16 %v353, %v352
        %v397 = vpack.c.b16 %v355, %v354
        %v398 = vpack.c.b16 %v357, %v356
        %v399 = vpack.c.b16 %v359, %v358
        %v400 = vpack.c.b16 %v361, %v360
        %v401 = vpack.c.b16 %v363, %v362
        %v402 = vpack.c.b16 %v365, %v364
        %v403 = vpack.c.b16 %v367, %v366
        %v404 = vpack.c.b16 %v369, %v368
        %v405 = vpack.c.b16 %v371, %v370
        %v406 = vpack.c.b16 %v373, %v372
        %v407 = vpack.c.b16 %v375, %v374
        %v408 = vpack.c.b16 %v377, %v376
        %v409 = vpack.c.b16 %v379, %v378
        %v410 = vpack.c.b16 %v381, %v380
        %v411 = vpack.c.b16 %v383, %v382
        %v412 = vpack.c.b16 %v385, %v384
        %v413 = vpack.c.b16 %v387, %v386
        %v414 = vpack.c.b16 %v389, %v388
        %v415 = vpack.c.b16 %v391, %v390
        %440 = vmatprep.subr.bf16.mxu0 0
        %441 = vmatpush1.bf16.msra.mxu0 %v399
        %442 = vmatprep.subr.bf16.mxu0 0
        %443 = vmatpush1.bf16.msra.mxu0 %v398
        %444 = vmatprep.subr.bf16.mxu0 0
        %445 = vmatpush1.bf16.msra.mxu0 %v397
        %446 = vmatprep.subr.bf16.mxu0 0
        %447 = vmatpush1.bf16.msra.mxu0 %v396
        %448 = vmatprep.subr.bf16.mxu0 0
        %449 = vmatpush1.bf16.msra.mxu0 %v395
        %450 = vmatprep.subr.bf16.mxu0 0
        %451 = vmatpush1.bf16.msra.mxu0 %v394
        %452 = vmatprep.subr.bf16.mxu0 0
        %453 = vmatpush1.bf16.msra.mxu0 %v393
        %454 = vmatprep.subr.bf16.mxu0 0
        %455 = vmatpush1.bf16.msra.mxu0 %v392
        %456 = vmatprep.subr.bf16.mxu0 0
        %457 = vmatpush2.bf16.msra.mxu0 %v407
        %458 = vmatprep.subr.bf16.mxu0 0
        %459 = vmatpush2.bf16.msra.mxu0 %v406
        %460 = vmatprep.subr.bf16.mxu0 0
        %461 = vmatpush2.bf16.msra.mxu0 %v405
        %462 = vmatprep.subr.bf16.mxu0 0
        %463 = vmatpush2.bf16.msra.mxu0 %v404
        %464 = vmatprep.subr.bf16.mxu0 0
        %465 = vmatpush2.bf16.msra.mxu0 %v403
        %466 = vmatprep.subr.bf16.mxu0 0
        %467 = vmatpush2.bf16.msra.mxu0 %v402
        %468 = vmatprep.subr.bf16.mxu0 0
        %469 = vmatpush2.bf16.msra.mxu0 %v401
        %470 = vmatprep.subr.bf16.mxu0 0
        %471 = vmatpush2.bf16.msra.mxu0 %v400
        %472 = vmatprep.mubr.bf16.mxu0 %v244
        %473 = vmatmul.mubr.bf16.gmra.mxu0 %v231
        %v474 = vpop.f32.mrf.mxu0
        %v475 = vadd.f32 0.0, %v474
        %v476 = vpop.f32.mrf.mxu0
        %v477 = vpop.f32.mrf.mxu0
        %v478 = vpop.f32.mrf.mxu0
        %479 = vdwg.mxu0
        %480 = vmatprep.subr.bf16.mxu0 0
        %481 = vmatpush1.bf16.msra.mxu0 %v415
        %482 = vmatprep.subr.bf16.mxu0 0
        %483 = vmatpush1.bf16.msra.mxu0 %v414
        %484 = vmatprep.subr.bf16.mxu0 0
        %485 = vmatpush1.bf16.msra.mxu0 %v413
        %486 = vmatprep.subr.bf16.mxu0 0
        %487 = vmatpush1.bf16.msra.mxu0 %v412
        %488 = vmatprep.subr.bf16.mxu0 0
        %489 = vmatpush1.bf16.msra.mxu0 %v411
        %490 = vmatprep.subr.bf16.mxu0 0
        %491 = vmatpush1.bf16.msra.mxu0 %v410
        %492 = vmatprep.subr.bf16.mxu0 0
        %493 = vmatpush1.bf16.msra.mxu0 %v409
        %494 = vmatprep.subr.bf16.mxu0 0
        %495 = vmatpush1.bf16.msra.mxu0 %v408
        %496 = vmatprep.subr.bf16.mxu0 0
        %497 = vmatpush2.bf16.msra.mxu0 0
        %498 = vmatprep.subr.bf16.mxu0 0
        %499 = vmatpush2.bf16.msra.mxu0 0
        %500 = vmatprep.subr.bf16.mxu0 0
        %501 = vmatpush2.bf16.msra.mxu0 0
        %502 = vmatprep.subr.bf16.mxu0 0
        %503 = vmatpush2.bf16.msra.mxu0 0
        %504 = vmatprep.subr.bf16.mxu0 0
        %505 = vmatpush2.bf16.msra.mxu0 0
        %506 = vmatprep.subr.bf16.mxu0 0
        %507 = vmatpush2.bf16.msra.mxu0 0
        %508 = vmatprep.subr.bf16.mxu0 0
        %509 = vmatpush2.bf16.msra.mxu0 0
        %510 = vmatprep.subr.bf16.mxu0 0
        %511 = vmatpush2.bf16.msra.mxu0 0
        %512 = vmatprep.mubr.bf16.mxu0 0
        %513 = vmatmul.mubr.bf16.gmra.mxu0 %v246
        %v514 = vpop.f32.mrf.mxu0
        %v515 = vadd.f32 %v475, %v514
        %v516 = vpop.f32.mrf.mxu0
        %v517 = vpop.f32.mrf.mxu0
        %v518 = vpop.f32.mrf.mxu0
        %519 = vdwg.mxu0
        %v520 = vld [vmem:[%s2] sm:$0x1]
        %v522 = vlaneseq
        %v523 = vshrl.u32 %v522, 7
        %v524 = vsub.s32 0, %v523
        %v525 = vrot.slane %v520, %v524
        %v527 = vmul.f32 %v515, %v525
        %v528 = vld [vmem:[%s3] sm:$0x1]
        %v530 = vlaneseq
        %v531 = vshrl.u32 %v530, 7
        %v532 = vsub.s32 0, %v531
        %v533 = vrot.slane %v528, %v532
        %v535 = vadd.f32 %v527, %v533
        %v536 = vmax.f32 %v535, 0.0
        %537 = vst [vmem:[%s219] sm:$0xff] %v536
        %s538 = sand.u32 %s130, 1
        %s539 = scalar_lea.sflag [#allocation4], %s538
        %s540 = sand.u32 %s130, 1
        %s541 = smul.addr %s540, 8
        %s542 = scalar_lea.vmem [#allocation5], %s541
        // Predicated region
        $region41: #{tpu_custom_call.1} parent=35 // pred_check
          %p543 = pneg %p140
        $region42: #{tpu_custom_call.1} parent=35 // pred_check_branch
          %545 = sbr.rel (%p543) target = $region44
        $region43: #{tpu_custom_call.1} parent=35 // pred_region
          %s547 = ssub.s32 128, 128
          %548 = vsyncadd %s539, %s547
          %s549 = smul.addr %s23, 2
          %s550 = sadd.s32 %s24, %s549
          %s551 = smul.addr %s550, 128
          %s552 = scalar_lea.hbm %s4, %s551
          %s554 = sshll.u32 %s542, 4
          %s555 = int_to_ptr.vmem [resolvable:$true] %s554
          %557 = dma.vmem_to_hbm [thread:$0]  %s555, 128, %s552, %s539
        $region44: #{tpu_custom_call.1} parent=35 // pred_fallthru
          _
      $region36: #{tpu_custom_call.1} parent=5 // pred_fallthru
        _
      %p558 = scmp.le.s32.totalorder 2, %s14
      // Predicated region
      $region45: #{tpu_custom_call.1} parent=5 // pred_check
        %p559 = pneg %p558
      $region46: #{tpu_custom_call.1} parent=5 // pred_check_branch
        %561 = sbr.rel (%p559) target = $region48
      $region47: #{tpu_custom_call.1} parent=5 // pred_region
        %s562 = ssub.s32 %s14, 2
        // Predicated region
        $region49: #{tpu_custom_call.1} parent=47 // pred_check
          %p563 = pneg %p146
        $region50: #{tpu_custom_call.1} parent=47 // pred_check_branch
          %565 = sbr.rel (%p563) target = $region52
        $region51: #{tpu_custom_call.1} parent=47 // pred_region
          %s566 = sand.u32 %s131, 1
          %s567 = scalar_lea.sflag [#allocation4], %s566
          %s568 = sand.u32 %s131, 1
          %s569 = smul.addr %s568, 8
          %s570 = scalar_lea.vmem [#allocation5], %s569
          %571 = dma.done %s567, 128
        $region52: #{tpu_custom_call.1} parent=47 // pred_fallthru
          _
      $region48: #{tpu_custom_call.1} parent=5 // pred_fallthru
        _
    $region6: #{tpu_custom_call.1} parent=1 // loop_footer
      %s18 = sadd.s32 1, %s14
    $region7: #{tpu_custom_call.1} parent=1 // loop_footer_branch
      %13 = sbr.rel target = $region3
    $region8: #{tpu_custom_call.1} parent=1 // loop_exit
      _
    %572 = vsyncpa [#allocation3], 1
    %s573 = scalar_lea.sflag [#allocation3], 1
    %574 = vsyncpa %s573, 1
    %575 = vsyncpa [#allocation4], 1
    %s576 = scalar_lea.sflag [#allocation4], 1
    %577 = vsyncpa %s576, 1

</llo_original>
